<compile_context>
chip_gen: v5e
topology: v5e:2x2
jax: 0.10.0
libtpu: 0.0.40
codegen_flags: <defaults>
</compile_context>

<pallas_src>
import jax
import jax.numpy as jnp
from jax import lax
from jax.experimental import pallas as pl
from jax.experimental.pallas import tpu as pltpu

INPUT_SIZE = 768
EMBED_SIZE = 256


def _mma_kernel(x_ref,
                w_emb_ref, b_emb_ref,
                w_a1_ref, b_a1_ref,
                w_a2_ref, b_a2_ref,
                w_proj_ref, b_proj_ref,
                out_ref):
    x = x_ref[...]                                                    # [TB, IN]

    # embedding: Linear(input_size, embed_size)
    h = jnp.dot(x, w_emb_ref[...],
                preferred_element_type=jnp.float32) + b_emb_ref[...]  # [TB, E]

    # AdaptiveAttention: Linear -> ReLU -> Linear -> Softmax, then gate h.
    a = jnp.dot(h, w_a1_ref[...],
                preferred_element_type=jnp.float32) + b_a1_ref[...]
    a = jnp.maximum(a, 0.0)
    a = jnp.dot(a, w_a2_ref[...],
                preferred_element_type=jnp.float32) + b_a2_ref[...]
    a = a - jnp.max(a, axis=-1, keepdims=True)
    e = jnp.exp(a)
    p = e * pl.reciprocal(jnp.sum(e, axis=-1, keepdims=True), approx=True)
    h = p * h                                                         # [TB, E]

    # fc + output_layer folded into a single [1, E] projection (done in the
    # wrapper).  Contract w_proj against the lane axis of h (same pattern as
    # q @ k^T), directly yielding a lane-dense [1, TB] row so the output store
    # is a full-width, unmasked vst.
    out_ref[...] = lax.dot_general(
        w_proj_ref[...], h,
        dimension_numbers=(((1,), (1,)), ((), ())),
        preferred_element_type=jnp.float32) + b_proj_ref[...]         # [1, TB]


def _round_up(n, m):
    return ((n + m - 1) // m) * m


def multimodal_agent_forward(x, params, *, tb=None):
    """x: [B, INPUT_SIZE] float32 -> [B, 1] float32."""
    B, IN = x.shape
    E = EMBED_SIZE
    assert IN == INPUT_SIZE

    # Pick a batch tile and pad the batch so the grid divides evenly.
    if tb is None:
        tb = 256 if B >= 256 else _round_up(B, 8)   # sublane-aligned small case
    Bp = _round_up(B, tb)
    if Bp != B:
        x = jnp.pad(x, ((0, Bp - B), (0, 0)))

    (w_emb, b_emb, w_a1, b_a1, w_a2, b_a2, w_fc, b_fc, w_out, b_out) = params

    # No nonlinearity between fc and output_layer -> fold once at trace time:
    #   ((p*h) @ W_fc + b_fc) @ W_out + b_out
    #     == (p*h) @ (W_fc @ W_out) + (b_fc @ W_out + b_out)
    w_proj = (w_fc @ w_out).reshape(1, E)            # [1, E]
    b_proj = (b_fc @ w_out + b_out).reshape(1, 1)    # [1, 1]

    # Weights/biases are small and fully resident; only the batch is tiled.
    wspec = lambda shape: pl.BlockSpec(shape, lambda i: (0, 0))
    in_specs = [
        pl.BlockSpec((tb, IN), lambda i: (i, 0)),   # x (batch-tiled)
        wspec((IN, E)), wspec((1, E)),              # embedding
        wspec((E, E)), wspec((1, E)),               # attention fc[0]
        wspec((E, E)), wspec((1, E)),               # attention fc[2]
        wspec((1, E)), wspec((1, 1)),               # folded fc + output_layer
    ]
    # Lane-dense output: each grid step writes a (1, tb) row of a (1, Bp) slab.
    out_spec = pl.BlockSpec((1, tb), lambda i: (0, i))

    out = pl.pallas_call(
        _mma_kernel,
        out_shape=jax.ShapeDtypeStruct((1, Bp), jnp.float32),
        grid_spec=pltpu.PrefetchScalarGridSpec(
            num_scalar_prefetch=0,
            grid=(Bp // tb,),
            in_specs=in_specs,
            out_specs=out_spec,
        ),
        compiler_params=pltpu.CompilerParams(
            dimension_semantics=("parallel",)),
    )(x, w_emb, b_emb, w_a1, b_a1, w_a2, b_a2, w_proj, b_proj)

    return out.reshape(Bp, 1)[:B]


def init_params(key):
    """Deterministic PyTorch-style (uniform +-1/sqrt(fan_in)) init.
    Weights stored as [in, out] (transposed vs. nn.Linear.weight)."""
    def linear(k, fan_in, fan_out):
        kw, kb = jax.random.split(k)
        bound = 1.0 / jnp.sqrt(float(fan_in))
        w = jax.random.uniform(kw, (fan_in, fan_out), jnp.float32, -bound, bound)
        b = jax.random.uniform(kb, (1, fan_out), jnp.float32, -bound, bound)
        return w, b

    ks = jax.random.split(key, 5)
    w_emb, b_emb = linear(ks[0], INPUT_SIZE, EMBED_SIZE)
    w_a1, b_a1 = linear(ks[1], EMBED_SIZE, EMBED_SIZE)
    w_a2, b_a2 = linear(ks[2], EMBED_SIZE, EMBED_SIZE)
    w_fc, b_fc = linear(ks[3], EMBED_SIZE, EMBED_SIZE)
    w_out, b_out = linear(ks[4], EMBED_SIZE, 1)
    return (w_emb, b_emb, w_a1, b_a1, w_a2, b_a2, w_fc, b_fc, w_out, b_out)


def reference_forward(x, params):
    """Unfused reference, mirrors the PyTorch module op-for-op."""
    (w_emb, b_emb, w_a1, b_a1, w_a2, b_a2, w_fc, b_fc, w_out, b_out) = params
    h = x @ w_emb + b_emb
    a = jnp.maximum(h @ w_a1 + b_a1, 0.0) @ w_a2 + b_a2
    p = jax.nn.softmax(a, axis=-1)
    h = p * h
    h = h @ w_fc + b_fc
    return h @ w_out + b_out


if __name__ == "__main__":
    key = jax.random.PRNGKey(0)
    kx, kx2, kp = jax.random.split(key, 3)
    params = init_params(kp)

    # Small, sublane-aligned batch: single grid step, no padding.
    B = 16
    x = jax.random.normal(kx, (B, INPUT_SIZE), dtype=jnp.float32)
    out = jax.block_until_ready(multimodal_agent_forward(x, params))
    ref = reference_forward(x, params)
    assert out.shape == (B, 1)
    assert jnp.allclose(out, ref, atol=1e-4, rtol=1e-4), "mismatch vs reference (B=16)"

    # Ragged batch: exercises the zero-pad + slice path.
    B2 = 10
    x2 = jax.random.normal(kx2, (B2, INPUT_SIZE), dtype=jnp.float32)
    out2 = jax.block_until_ready(multimodal_agent_forward(x2, params))
    ref2 = reference_forward(x2, params)
    assert out2.shape == (B2, 1)
    assert jnp.allclose(out2, ref2, atol=1e-4, rtol=1e-4), "mismatch vs reference (B=10)"

    print("KERNEL_OK")
</pallas_src>

<mosaic_0001>
module attributes {stable_mosaic.version = 11 : i64} {
  func.func @_mma_kernel(%arg0: i32, %arg1: memref<16x768xf32, #tpu.memory_space<vmem>>, %arg2: memref<768x256xf32, #tpu.memory_space<vmem>>, %arg3: memref<1x256xf32, #tpu.memory_space<vmem>>, %arg4: memref<256x256xf32, #tpu.memory_space<vmem>>, %arg5: memref<1x256xf32, #tpu.memory_space<vmem>>, %arg6: memref<256x256xf32, #tpu.memory_space<vmem>>, %arg7: memref<1x256xf32, #tpu.memory_space<vmem>>, %arg8: memref<1x256xf32, #tpu.memory_space<vmem>>, %arg9: memref<1x1xf32, #tpu.memory_space<vmem>>, %arg10: memref<1x16xf32, #tpu.memory_space<vmem>>) attributes {dimension_semantics = [#tpu.dimension_semantics<parallel>], iteration_bounds = array<i64: 1>, scalar_prefetch = 0 : i64, scratch_operands = 0 : i64, tpu.core_type = #tpu.core_type<tc>, window_params = [{transform_indices = @transform_0, window_bounds = array<i64: 16, 768>}, {pipeline_mode = #tpu.pipeline_mode<synchronous>, transform_indices = @transform_1, window_bounds = array<i64: 768, 256>}, {pipeline_mode = #tpu.pipeline_mode<synchronous>, transform_indices = @transform_2, window_bounds = array<i64: 1, 256>}, {pipeline_mode = #tpu.pipeline_mode<synchronous>, transform_indices = @transform_3, window_bounds = array<i64: 256, 256>}, {pipeline_mode = #tpu.pipeline_mode<synchronous>, transform_indices = @transform_4, window_bounds = array<i64: 1, 256>}, {pipeline_mode = #tpu.pipeline_mode<synchronous>, transform_indices = @transform_5, window_bounds = array<i64: 256, 256>}, {pipeline_mode = #tpu.pipeline_mode<synchronous>, transform_indices = @transform_6, window_bounds = array<i64: 1, 256>}, {pipeline_mode = #tpu.pipeline_mode<synchronous>, transform_indices = @transform_7, window_bounds = array<i64: 1, 256>}, {pipeline_mode = #tpu.pipeline_mode<synchronous>, transform_indices = @transform_8, window_bounds = array<i64: 1, 1>}, {transform_indices = @transform_9, window_bounds = array<i64: 1, 16>}]} {
    %c0 = arith.constant 0 : index
    %c0_0 = arith.constant 0 : index
    %0 = vector.load %arg1[%c0, %c0_0] : memref<16x768xf32, #tpu.memory_space<vmem>>, vector<16x768xf32>
    %c0_1 = arith.constant 0 : index
    %c0_2 = arith.constant 0 : index
    %1 = vector.load %arg2[%c0_1, %c0_2] : memref<768x256xf32, #tpu.memory_space<vmem>>, vector<768x256xf32>
    %cst = arith.constant dense<0.000000e+00> : vector<16x256xf32>
    %2 = tpu.matmul %0, %1, %cst {dimension_numbers = #tpu.dot_dimension_numbers<[1], [0], [0], [1], [0, 0, 1, 1], [], []>} : vector<16x768xf32>, vector<768x256xf32>, vector<16x256xf32> -> vector<16x256xf32>
    %c0_3 = arith.constant 0 : index
    %c0_4 = arith.constant 0 : index
    %3 = vector.load %arg3[%c0_3, %c0_4] : memref<1x256xf32, #tpu.memory_space<vmem>>, vector<1x256xf32>
    %4 = vector.broadcast %3 : vector<1x256xf32> to vector<16x256xf32>
    %5 = arith.addf %2, %4 : vector<16x256xf32>
    %c0_5 = arith.constant 0 : index
    %c0_6 = arith.constant 0 : index
    %6 = vector.load %arg4[%c0_5, %c0_6] : memref<256x256xf32, #tpu.memory_space<vmem>>, vector<256x256xf32>
    %cst_7 = arith.constant dense<0.000000e+00> : vector<16x256xf32>
    %7 = tpu.matmul %5, %6, %cst_7 {dimension_numbers = #tpu.dot_dimension_numbers<[1], [0], [0], [1], [0, 0, 1, 1], [], []>} : vector<16x256xf32>, vector<256x256xf32>, vector<16x256xf32> -> vector<16x256xf32>
    %c0_8 = arith.constant 0 : index
    %c0_9 = arith.constant 0 : index
    %8 = vector.load %arg5[%c0_8, %c0_9] : memref<1x256xf32, #tpu.memory_space<vmem>>, vector<1x256xf32>
    %9 = vector.broadcast %8 : vector<1x256xf32> to vector<16x256xf32>
    %10 = arith.addf %7, %9 : vector<16x256xf32>
    %cst_10 = arith.constant 0.000000e+00 : f32
    %11 = vector.broadcast %cst_10 : f32 to vector<16x256xf32>
    %12 = arith.maximumf %10, %11 : vector<16x256xf32>
    %c0_11 = arith.constant 0 : index
    %c0_12 = arith.constant 0 : index
    %13 = vector.load %arg6[%c0_11, %c0_12] : memref<256x256xf32, #tpu.memory_space<vmem>>, vector<256x256xf32>
    %cst_13 = arith.constant dense<0.000000e+00> : vector<16x256xf32>
    %14 = tpu.matmul %12, %13, %cst_13 {dimension_numbers = #tpu.dot_dimension_numbers<[1], [0], [0], [1], [0, 0, 1, 1], [], []>} : vector<16x256xf32>, vector<256x256xf32>, vector<16x256xf32> -> vector<16x256xf32>
    %c0_14 = arith.constant 0 : index
    %c0_15 = arith.constant 0 : index
    %15 = vector.load %arg7[%c0_14, %c0_15] : memref<1x256xf32, #tpu.memory_space<vmem>>, vector<1x256xf32>
    %16 = vector.broadcast %15 : vector<1x256xf32> to vector<16x256xf32>
    %17 = arith.addf %14, %16 : vector<16x256xf32>
    %cst_16 = arith.constant dense<0xFF800000> : vector<16xf32>
    %18 = vector.multi_reduction <maximumf>, %17, %cst_16 [1] : vector<16x256xf32> to vector<16xf32>
    %19 = vector.shape_cast %18 : vector<16xf32> to vector<16x1xf32>
    %20 = vector.broadcast %19 : vector<16x1xf32> to vector<16x256xf32>
    %21 = arith.subf %17, %20 : vector<16x256xf32>
    %22 = math.exp %21 : vector<16x256xf32>
    %cst_17 = arith.constant dense<0.000000e+00> : vector<16xf32>
    %23 = vector.multi_reduction <add>, %22, %cst_17 [1] : vector<16x256xf32> to vector<16xf32>
    %24 = vector.shape_cast %23 : vector<16xf32> to vector<16x1xf32>
    %25 = tpu.reciprocal %24 {approx = true} : vector<16x1xf32> -> vector<16x1xf32>
    %26 = vector.broadcast %25 : vector<16x1xf32> to vector<16x256xf32>
    %27 = arith.mulf %22, %26 : vector<16x256xf32>
    %28 = arith.mulf %27, %5 : vector<16x256xf32>
    %c0_18 = arith.constant 0 : index
    %c0_19 = arith.constant 0 : index
    %29 = vector.load %arg8[%c0_18, %c0_19] : memref<1x256xf32, #tpu.memory_space<vmem>>, vector<1x256xf32>
    %cst_20 = arith.constant dense<0.000000e+00> : vector<1x16xf32>
    %30 = tpu.matmul %29, %28, %cst_20 {dimension_numbers = #tpu.dot_dimension_numbers<[1], [1], [0], [0], [0, 0, 1, 0], [], []>} : vector<1x256xf32>, vector<16x256xf32>, vector<1x16xf32> -> vector<1x16xf32>
    %c0_21 = arith.constant 0 : index
    %c0_22 = arith.constant 0 : index
    %31 = vector.load %arg9[%c0_21, %c0_22] : memref<1x1xf32, #tpu.memory_space<vmem>>, vector<1x1xf32>
    %32 = vector.broadcast %31 : vector<1x1xf32> to vector<1x16xf32>
    %33 = arith.addf %30, %32 : vector<1x16xf32>
    %c0_23 = arith.constant 0 : index
    %c0_24 = arith.constant 0 : index
    %34 = vector.load %arg10[%c0_23, %c0_24] : memref<1x16xf32, #tpu.memory_space<vmem>>, vector<1x16xf32>
    tpu.vector_store %arg10[%c0_23, %c0_24], %33 {strides = array<i32>} : memref<1x16xf32, #tpu.memory_space<vmem>>, vector<1x16xf32>,
    return
  }
  func.func @transform_0(%arg0: i32) -> (i32, i32) {
    %c0_i32 = arith.constant 0 : i32
    %c0_i32_0 = arith.constant 0 : i32
    return %arg0, %c0_i32 : i32, i32
  }
  func.func @transform_1(%arg0: i32) -> (i32, i32) {
    %c0_i32 = arith.constant 0 : i32
    %c0_i32_0 = arith.constant 0 : i32
    %c0_i32_1 = arith.constant 0 : i32
    return %c0_i32, %c0_i32_0 : i32, i32
  }
  func.func @transform_2(%arg0: i32) -> (i32, i32) {
    %c0_i32 = arith.constant 0 : i32
    %c0_i32_0 = arith.constant 0 : i32
    %c0_i32_1 = arith.constant 0 : i32
    return %c0_i32, %c0_i32_0 : i32, i32
  }
  func.func @transform_3(%arg0: i32) -> (i32, i32) {
    %c0_i32 = arith.constant 0 : i32
    %c0_i32_0 = arith.constant 0 : i32
    %c0_i32_1 = arith.constant 0 : i32
    return %c0_i32, %c0_i32_0 : i32, i32
  }
  func.func @transform_4(%arg0: i32) -> (i32, i32) {
    %c0_i32 = arith.constant 0 : i32
    %c0_i32_0 = arith.constant 0 : i32
    %c0_i32_1 = arith.constant 0 : i32
    return %c0_i32, %c0_i32_0 : i32, i32
  }
  func.func @transform_5(%arg0: i32) -> (i32, i32) {
    %c0_i32 = arith.constant 0 : i32
    %c0_i32_0 = arith.constant 0 : i32
    %c0_i32_1 = arith.constant 0 : i32
    return %c0_i32, %c0_i32_0 : i32, i32
  }
  func.func @transform_6(%arg0: i32) -> (i32, i32) {
    %c0_i32 = arith.constant 0 : i32
    %c0_i32_0 = arith.constant 0 : i32
    %c0_i32_1 = arith.constant 0 : i32
    return %c0_i32, %c0_i32_0 : i32, i32
  }
  func.func @transform_7(%arg0: i32) -> (i32, i32) {
    %c0_i32 = arith.constant 0 : i32
    %c0_i32_0 = arith.constant 0 : i32
    %c0_i32_1 = arith.constant 0 : i32
    return %c0_i32, %c0_i32_0 : i32, i32
  }
  func.func @transform_8(%arg0: i32) -> (i32, i32) {
    %c0_i32 = arith.constant 0 : i32
    %c0_i32_0 = arith.constant 0 : i32
    %c0_i32_1 = arith.constant 0 : i32
    return %c0_i32, %c0_i32_0 : i32, i32
  }
  func.func @transform_9(%arg0: i32) -> (i32, i32) {
    %c0_i32 = arith.constant 0 : i32
    %c0_i32_0 = arith.constant 0 : i32
    return %c0_i32, %arg0 : i32, i32
  }
}

</mosaic_0001>

<llo_original>
// kernel: tpu_custom_call.1
$region0: #{tpu_custom_call.1}
  #allocation0 [shape = 'u32[]', space=smem, size = 0x4, offset = 0x4, fixed_abs, tag = 'smem constant byte address 0x4 - core index']
  #allocation1 [shape = 'u32[72,128]{1,0:T(1,128)}', space=vmem, size = 0x9000, scoped, tag = 'internal scratch']
  #allocation2 [shape = 'f32[1,1]{1,0:T(1,128)S(1)}', space=vmem, size = 0x200, scoped, tag = 'scoped memory for tpu_custom_call.1']
  %s0 = inlined_call_operand.hbm [shape: f32[16,768], index: 0, kind: input, shape index: {}]
  %s1 = inlined_call_operand.hbm [shape: f32[768,256], index: 1, kind: input, shape index: {}]
  %s2 = inlined_call_operand.vmem [shape: f32[1,256], index: 2, kind: input, shape index: {}]
  %s3 = inlined_call_operand.hbm [shape: f32[256,256], index: 3, kind: input, shape index: {}]
  %s4 = inlined_call_operand.vmem [shape: f32[1,256], index: 4, kind: input, shape index: {}]
  %s5 = inlined_call_operand.hbm [shape: f32[256,256], index: 5, kind: input, shape index: {}]
  %s6 = inlined_call_operand.vmem [shape: f32[1,256], index: 6, kind: input, shape index: {}]
  %s7 = inlined_call_operand.vmem [shape: f32[1,256], index: 7, kind: input, shape index: {}]
  %s8 = inlined_call_operand.<no memory space> [shape: f32[1,1], index: 8, kind: input, shape index: {}]
  %s9 = inlined_call_operand.hbm [shape: f32[1,16], index: 9, kind: output, shape index: {}]
  %s10 = sld [smem:[#allocation0]]
  $region62: #{tpu_custom_call.1} parent=0
    _
  %s12 = ssub.s32 1, %s10
  %s13 = scalar_select 0, %s12, %s10
  %v14 = vstv %s8
  %15 = vst [vmem:[#allocation2] sm:$0x1] %v14
  $region1: #{tpu_custom_call.1} parent=0
    #allocation3 [shape = 'u8[49152]{0}', space=vmem, size = 0xc000, scoped, tag = 'input window, operand 0, single buffered']
    #allocation4 [shape = 's32[1]{0}', space=sflag, size = 0x4, scoped, tag = 'scoped memory for tpu_custom_call.1']
    #allocation5 [shape = 's32[1]{0}', space=sflag, size = 0x4, scoped, tag = 'scoped memory for tpu_custom_call.1']
    #allocation6 [shape = 'u8[786432]{0}', space=vmem, size = 0xc0000, scoped, tag = 'input window, operand 1, single buffered']
    #allocation7 [shape = 's32[1]{0}', space=sflag, size = 0x4, scoped, tag = 'scoped memory for tpu_custom_call.1']
    #allocation8 [shape = 'u8[262144]{0}', space=vmem, size = 0x40000, scoped, tag = 'input window, operand 3, single buffered']
    #allocation9 [shape = 'u8[262144]{0}', space=vmem, size = 0x40000, scoped, tag = 'input window, operand 5, single buffered']
    #allocation10 [shape = 's32[1]{0}', space=sflag, size = 0x4, scoped, tag = 'scoped memory for tpu_custom_call.1']
    #allocation11 [shape = 'u8[512]{0}', space=vmem, size = 0x400, scoped, tag = 'output window, operand 0, single buffered']
    %16 = vsyncpa [#allocation4], 0
    %17 = vsyncpa [#allocation7], 0
    %18 = vsyncpa [#allocation10], 0
    %19 = vsyncpa [#allocation5], 0
    // Predicated region
    $region2: #{tpu_custom_call.1} parent=1 // pred_check
      _
    $region3: #{tpu_custom_call.1} parent=1 // pred_check_branch
      %21 = sbr.rel (0) target = $region5
    $region4: #{tpu_custom_call.1} parent=1 // pred_region
      %23 = vsyncadd [#allocation4], 0
      %s24 = sshll.u32 %s0, 4
      %s25 = int_to_ptr.hbm [resolvable:$true] %s24
      %s26 = sshll.u32 [#allocation3], 4
      %s27 = int_to_ptr.vmem [resolvable:$true] %s26
      %32 = dma.hbm_to_vmem [thread:$0]  %s25, 1536, %s27, [#allocation4], 768, 768, 48
    $region5: #{tpu_custom_call.1} parent=1 // pred_fallthru
      _
    // Predicated region
    $region6: #{tpu_custom_call.1} parent=1 // pred_check
      _
    $region7: #{tpu_custom_call.1} parent=1 // pred_check_branch
      %34 = sbr.rel (0) target = $region9
    $region8: #{tpu_custom_call.1} parent=1 // pred_region
      %36 = vsyncadd [#allocation7], 0
      %s37 = sshll.u32 %s1, 4
      %s38 = int_to_ptr.hbm [resolvable:$true] %s37
      %s39 = sshll.u32 [#allocation6], 4
      %s40 = int_to_ptr.vmem [resolvable:$true] %s39
      %45 = dma.hbm_to_vmem [thread:$0]  %s38, 24576, %s40, [#allocation7], 256, 256, 16
    $region9: #{tpu_custom_call.1} parent=1 // pred_fallthru
      _
    // Predicated region
    $region10: #{tpu_custom_call.1} parent=1 // pred_check
      _
    $region11: #{tpu_custom_call.1} parent=1 // pred_check_branch
      %47 = sbr.rel (0) target = $region13
    $region12: #{tpu_custom_call.1} parent=1 // pred_region
      _
    $region13: #{tpu_custom_call.1} parent=1 // pred_fallthru
      _
    // Predicated region
    $region14: #{tpu_custom_call.1} parent=1 // pred_check
      _
    $region15: #{tpu_custom_call.1} parent=1 // pred_check_branch
      %49 = sbr.rel (0) target = $region17
    $region16: #{tpu_custom_call.1} parent=1 // pred_region
      %51 = vsyncadd [#allocation7], 0
      %s52 = sshll.u32 %s3, 4
      %s53 = int_to_ptr.hbm [resolvable:$true] %s52
      %s54 = sshll.u32 [#allocation8], 4
      %s55 = int_to_ptr.vmem [resolvable:$true] %s54
      %60 = dma.hbm_to_vmem [thread:$0]  %s53, 8192, %s55, [#allocation7], 256, 256, 16
    $region17: #{tpu_custom_call.1} parent=1 // pred_fallthru
      _
    // Predicated region
    $region18: #{tpu_custom_call.1} parent=1 // pred_check
      _
    $region19: #{tpu_custom_call.1} parent=1 // pred_check_branch
      %62 = sbr.rel (0) target = $region21
    $region20: #{tpu_custom_call.1} parent=1 // pred_region
      _
    $region21: #{tpu_custom_call.1} parent=1 // pred_fallthru
      _
    // Predicated region
    $region22: #{tpu_custom_call.1} parent=1 // pred_check
      _
    $region23: #{tpu_custom_call.1} parent=1 // pred_check_branch
      %64 = sbr.rel (0) target = $region25
    $region24: #{tpu_custom_call.1} parent=1 // pred_region
      %66 = vsyncadd [#allocation10], 0
      %s67 = sshll.u32 %s5, 4
      %s68 = int_to_ptr.hbm [resolvable:$true] %s67
      %s69 = sshll.u32 [#allocation9], 4
      %s70 = int_to_ptr.vmem [resolvable:$true] %s69
      %75 = dma.hbm_to_vmem [thread:$0]  %s68, 8192, %s70, [#allocation10], 256, 256, 16
    $region25: #{tpu_custom_call.1} parent=1 // pred_fallthru
      _
    // Predicated region
    $region26: #{tpu_custom_call.1} parent=1 // pred_check
      _
    $region27: #{tpu_custom_call.1} parent=1 // pred_check_branch
      %77 = sbr.rel (0) target = $region29
    $region28: #{tpu_custom_call.1} parent=1 // pred_region
      _
    $region29: #{tpu_custom_call.1} parent=1 // pred_fallthru
      _
    // Predicated region
    $region30: #{tpu_custom_call.1} parent=1 // pred_check
      _
    $region31: #{tpu_custom_call.1} parent=1 // pred_check_branch
      %79 = sbr.rel (0) target = $region33
    $region32: #{tpu_custom_call.1} parent=1 // pred_region
      _
    $region33: #{tpu_custom_call.1} parent=1 // pred_fallthru
      _
    // Predicated region
    $region34: #{tpu_custom_call.1} parent=1 // pred_check
      _
    $region35: #{tpu_custom_call.1} parent=1 // pred_check_branch
      %81 = sbr.rel (0) target = $region37
    $region36: #{tpu_custom_call.1} parent=1 // pred_region
      _
    $region37: #{tpu_custom_call.1} parent=1 // pred_fallthru
      _
    // Predicated region
    $region38: #{tpu_custom_call.1} parent=1 // pred_check
      _
    $region39: #{tpu_custom_call.1} parent=1 // pred_check_branch
      %83 = sbr.rel (0) target = $region41
    $region40: #{tpu_custom_call.1} parent=1 // pred_region
      %85 = dma.done [#allocation4], 1536
    $region41: #{tpu_custom_call.1} parent=1 // pred_fallthru
      _
    // Predicated region
    $region42: #{tpu_custom_call.1} parent=1 // pred_check
      _
    $region43: #{tpu_custom_call.1} parent=1 // pred_check_branch
      %87 = sbr.rel (0) target = $region45
    $region44: #{tpu_custom_call.1} parent=1 // pred_region
      %89 = dma.done [#allocation7], 24576
    $region45: #{tpu_custom_call.1} parent=1 // pred_fallthru
      _
    // Predicated region
    $region46: #{tpu_custom_call.1} parent=1 // pred_check
      _
    $region47: #{tpu_custom_call.1} parent=1 // pred_check_branch
      %91 = sbr.rel (0) target = $region49
    $region48: #{tpu_custom_call.1} parent=1 // pred_region
      %93 = dma.done [#allocation7], 8192
    $region49: #{tpu_custom_call.1} parent=1 // pred_fallthru
      _
    // Predicated region
    $region50: #{tpu_custom_call.1} parent=1 // pred_check
      _
    $region51: #{tpu_custom_call.1} parent=1 // pred_check_branch
      %95 = sbr.rel (0) target = $region53
    $region52: #{tpu_custom_call.1} parent=1 // pred_region
      %97 = dma.done [#allocation10], 8192
    $region53: #{tpu_custom_call.1} parent=1 // pred_fallthru
      _
    %v98 = vld [vmem:[#allocation3] sm:$0xff]
    %v99 = vld [vmem:[#allocation3 + $0x8] sm:$0xff]
    %v100 = vld [vmem:[#allocation3 + $0x10] sm:$0xff]
    %v101 = vld [vmem:[#allocation3 + $0x18] sm:$0xff]
    %v102 = vld [vmem:[#allocation3 + $0x20] sm:$0xff]
    %v103 = vld [vmem:[#allocation3 + $0x28] sm:$0xff]
    %v104 = vld [vmem:[#allocation3 + $0x30] sm:$0xff]
    %v105 = vld [vmem:[#allocation3 + $0x38] sm:$0xff]
    %v106 = vld [vmem:[#allocation3 + $0x40] sm:$0xff]
    %v107 = vld [vmem:[#allocation3 + $0x48] sm:$0xff]
    %v108 = vld [vmem:[#allocation3 + $0x50] sm:$0xff]
    %v109 = vld [vmem:[#allocation3 + $0x58] sm:$0xff]
    %v110 = vld [vmem:[#allocation6] sm:$0xff]
    %v111 = vld [vmem:[#allocation6 + $0x8] sm:$0xff]
    %v112 = vld [vmem:[#allocation6 + $0x10] sm:$0xff]
    %v113 = vld [vmem:[#allocation6 + $0x18] sm:$0xff]
    %v114 = vld [vmem:[#allocation6 + $0x20] sm:$0xff]
    %v115 = vld [vmem:[#allocation6 + $0x28] sm:$0xff]
    %v116 = vld [vmem:[#allocation6 + $0x30] sm:$0xff]
    %v117 = vld [vmem:[#allocation6 + $0x38] sm:$0xff]
    %v118 = vld [vmem:[#allocation6 + $0x40] sm:$0xff]
    %v119 = vld [vmem:[#allocation6 + $0x48] sm:$0xff]
    %v120 = vld [vmem:[#allocation6 + $0x50] sm:$0xff]
    %v121 = vld [vmem:[#allocation6 + $0x58] sm:$0xff]
    %v122 = vld [vmem:[#allocation6 + $0x60] sm:$0xff]
    %v123 = vld [vmem:[#allocation6 + $0x68] sm:$0xff]
    %v124 = vld [vmem:[#allocation6 + $0x70] sm:$0xff]
    %v125 = vld [vmem:[#allocation6 + $0x78] sm:$0xff]
    %v126 = vld [vmem:[#allocation6 + $0x80] sm:$0xff]
    %v127 = vld [vmem:[#allocation6 + $0x88] sm:$0xff]
    %v128 = vld [vmem:[#allocation6 + $0x90] sm:$0xff]
    %v129 = vld [vmem:[#allocation6 + $0x98] sm:$0xff]
    %v130 = vld [vmem:[#allocation6 + $0xa0] sm:$0xff]
    %v131 = vld [vmem:[#allocation6 + $0xa8] sm:$0xff]
    %v132 = vld [vmem:[#allocation6 + $0xb0] sm:$0xff]
    %v133 = vld [vmem:[#allocation6 + $0xb8] sm:$0xff]
    %v134 = vld [vmem:[#allocation6 + $0xc0] sm:$0xff]
    %v135 = vld [vmem:[#allocation6 + $0xc8] sm:$0xff]
    %v136 = vld [vmem:[#allocation6 + $0xd0] sm:$0xff]
    %v137 = vld [vmem:[#allocation6 + $0xd8] sm:$0xff]
    %v138 = vld [vmem:[#allocation6 + $0xe0] sm:$0xff]
    %v139 = vld [vmem:[#allocation6 + $0xe8] sm:$0xff]
    %v140 = vld [vmem:[#allocation6 + $0xf0] sm:$0xff]
    %v141 = vld [vmem:[#allocation6 + $0xf8] sm:$0xff]
    %v142 = vld [vmem:[#allocation6 + $0x100] sm:$0xff]
    %v143 = vld [vmem:[#allocation6 + $0x108] sm:$0xff]
    %v144 = vld [vmem:[#allocation6 + $0x110] sm:$0xff]
    %v145 = vld [vmem:[#allocation6 + $0x118] sm:$0xff]
    %v146 = vld [vmem:[#allocation6 + $0x120] sm:$0xff]
    %v147 = vld [vmem:[#allocation6 + $0x128] sm:$0xff]
    %v148 = vld [vmem:[#allocation6 + $0x130] sm:$0xff]
    %v149 = vld [vmem:[#allocation6 + $0x138] sm:$0xff]
    %v150 = vld [vmem:[#allocation6 + $0x140] sm:$0xff]
    %v151 = vld [vmem:[#allocation6 + $0x148] sm:$0xff]
    %v152 = vld [vmem:[#allocation6 + $0x150] sm:$0xff]
    %v153 = vld [vmem:[#allocation6 + $0x158] sm:$0xff]
    %v154 = vld [vmem:[#allocation6 + $0x160] sm:$0xff]
    %v155 = vld [vmem:[#allocation6 + $0x168] sm:$0xff]
    %v156 = vld [vmem:[#allocation6 + $0x170] sm:$0xff]
    %v157 = vld [vmem:[#allocation6 + $0x178] sm:$0xff]
    %v158 = vld [vmem:[#allocation6 + $0x180] sm:$0xff]
    %v159 = vld [vmem:[#allocation6 + $0x188] sm:$0xff]
    %v160 = vld [vmem:[#allocation6 + $0x190] sm:$0xff]
    %v161 = vld [vmem:[#allocation6 + $0x198] sm:$0xff]
    %v162 = vld [vmem:[#allocation6 + $0x1a0] sm:$0xff]
    %v163 = vld [vmem:[#allocation6 + $0x1a8] sm:$0xff]
    %v164 = vld [vmem:[#allocation6 + $0x1b0] sm:$0xff]
    %v165 = vld [vmem:[#allocation6 + $0x1b8] sm:$0xff]
    %v166 = vld [vmem:[#allocation6 + $0x1c0] sm:$0xff]
    %v167 = vld [vmem:[#allocation6 + $0x1c8] sm:$0xff]
    %v168 = vld [vmem:[#allocation6 + $0x1d0] sm:$0xff]
    %v169 = vld [vmem:[#allocation6 + $0x1d8] sm:$0xff]
    %v170 = vld [vmem:[#allocation6 + $0x1e0] sm:$0xff]
    %v171 = vld [vmem:[#allocation6 + $0x1e8] sm:$0xff]
    %v172 = vld [vmem:[#allocation6 + $0x1f0] sm:$0xff]
    %v173 = vld [vmem:[#allocation6 + $0x1f8] sm:$0xff]
    %v174 = vld [vmem:[#allocation6 + $0x200] sm:$0xff]
    %v175 = vld [vmem:[#allocation6 + $0x208] sm:$0xff]
    %v176 = vld [vmem:[#allocation6 + $0x210] sm:$0xff]
    %v177 = vld [vmem:[#allocation6 + $0x218] sm:$0xff]
    %v178 = vld [vmem:[#allocation6 + $0x220] sm:$0xff]
    %v179 = vld [vmem:[#allocation6 + $0x228] sm:$0xff]
    %v180 = vld [vmem:[#allocation6 + $0x230] sm:$0xff]
    %v181 = vld [vmem:[#allocation6 + $0x238] sm:$0xff]
    %v182 = vld [vmem:[#allocation6 + $0x240] sm:$0xff]
    %v183 = vld [vmem:[#allocation6 + $0x248] sm:$0xff]
    %v184 = vld [vmem:[#allocation6 + $0x250] sm:$0xff]
    %v185 = vld [vmem:[#allocation6 + $0x258] sm:$0xff]
    %v186 = vld [vmem:[#allocation6 + $0x260] sm:$0xff]
    %v187 = vld [vmem:[#allocation6 + $0x268] sm:$0xff]
    %v188 = vld [vmem:[#allocation6 + $0x270] sm:$0xff]
    %v189 = vld [vmem:[#allocation6 + $0x278] sm:$0xff]
    %v190 = vld [vmem:[#allocation6 + $0x280] sm:$0xff]
    %v191 = vld [vmem:[#allocation6 + $0x288] sm:$0xff]
    %v192 = vld [vmem:[#allocation6 + $0x290] sm:$0xff]
    %v193 = vld [vmem:[#allocation6 + $0x298] sm:$0xff]
    %v194 = vld [vmem:[#allocation6 + $0x2a0] sm:$0xff]
    %v195 = vld [vmem:[#allocation6 + $0x2a8] sm:$0xff]
    %v196 = vld [vmem:[#allocation6 + $0x2b0] sm:$0xff]
    %v197 = vld [vmem:[#allocation6 + $0x2b8] sm:$0xff]
    %v198 = vld [vmem:[#allocation6 + $0x2c0] sm:$0xff]
    %v199 = vld [vmem:[#allocation6 + $0x2c8] sm:$0xff]
    %v200 = vld [vmem:[#allocation6 + $0x2d0] sm:$0xff]
    %v201 = vld [vmem:[#allocation6 + $0x2d8] sm:$0xff]
    %v202 = vld [vmem:[#allocation6 + $0x2e0] sm:$0xff]
    %v203 = vld [vmem:[#allocation6 + $0x2e8] sm:$0xff]
    %v204 = vld [vmem:[#allocation6 + $0x2f0] sm:$0xff]
    %v205 = vld [vmem:[#allocation6 + $0x2f8] sm:$0xff]
    %v206 = vld [vmem:[#allocation6 + $0x300] sm:$0xff]
    %v207 = vld [vmem:[#allocation6 + $0x308] sm:$0xff]
    %v208 = vld [vmem:[#allocation6 + $0x310] sm:$0xff]
    %v209 = vld [vmem:[#allocation6 + $0x318] sm:$0xff]
    %v210 = vld [vmem:[#allocation6 + $0x320] sm:$0xff]
    %v211 = vld [vmem:[#allocation6 + $0x328] sm:$0xff]
    %v212 = vld [vmem:[#allocation6 + $0x330] sm:$0xff]
    %v213 = vld [vmem:[#allocation6 + $0x338] sm:$0xff]
    %v214 = vld [vmem:[#allocation6 + $0x340] sm:$0xff]
    %v215 = vld [vmem:[#allocation6 + $0x348] sm:$0xff]
    %v216 = vld [vmem:[#allocation6 + $0x350] sm:$0xff]
    %v217 = vld [vmem:[#allocation6 + $0x358] sm:$0xff]
    %v218 = vld [vmem:[#allocation6 + $0x360] sm:$0xff]
    %v219 = vld [vmem:[#allocation6 + $0x368] sm:$0xff]
    %v220 = vld [vmem:[#allocation6 + $0x370] sm:$0xff]
    %v221 = vld [vmem:[#allocation6 + $0x378] sm:$0xff]
    %v222 = vld [vmem:[#allocation6 + $0x380] sm:$0xff]
    %v223 = vld [vmem:[#allocation6 + $0x388] sm:$0xff]
    %v224 = vld [vmem:[#allocation6 + $0x390] sm:$0xff]
    %v225 = vld [vmem:[#allocation6 + $0x398] sm:$0xff]
    %v226 = vld [vmem:[#allocation6 + $0x3a0] sm:$0xff]
    %v227 = vld [vmem:[#allocation6 + $0x3a8] sm:$0xff]
    %v228 = vld [vmem:[#allocation6 + $0x3b0] sm:$0xff]
    %v229 = vld [vmem:[#allocation6 + $0x3b8] sm:$0xff]
    %v230 = vld [vmem:[#allocation6 + $0x3c0] sm:$0xff]
    %v231 = vld [vmem:[#allocation6 + $0x3c8] sm:$0xff]
    %v232 = vld [vmem:[#allocation6 + $0x3d0] sm:$0xff]
    %v233 = vld [vmem:[#allocation6 + $0x3d8] sm:$0xff]
    %v234 = vld [vmem:[#allocation6 + $0x3e0] sm:$0xff]
    %v235 = vld [vmem:[#allocation6 + $0x3e8] sm:$0xff]
    %v236 = vld [vmem:[#allocation6 + $0x3f0] sm:$0xff]
    %v237 = vld [vmem:[#allocation6 + $0x3f8] sm:$0xff]
    %v238 = vld [vmem:[#allocation6 + $0x400] sm:$0xff]
    %v239 = vld [vmem:[#allocation6 + $0x408] sm:$0xff]
    %v240 = vld [vmem:[#allocation6 + $0x410] sm:$0xff]
    %v241 = vld [vmem:[#allocation6 + $0x418] sm:$0xff]
    %v242 = vld [vmem:[#allocation6 + $0x420] sm:$0xff]
    %v243 = vld [vmem:[#allocation6 + $0x428] sm:$0xff]
    %v244 = vld [vmem:[#allocation6 + $0x430] sm:$0xff]
    %v245 = vld [vmem:[#allocation6 + $0x438] sm:$0xff]
    %v246 = vld [vmem:[#allocation6 + $0x440] sm:$0xff]
    %v247 = vld [vmem:[#allocation6 + $0x448] sm:$0xff]
    %v248 = vld [vmem:[#allocation6 + $0x450] sm:$0xff]
    %v249 = vld [vmem:[#allocation6 + $0x458] sm:$0xff]
    %v250 = vld [vmem:[#allocation6 + $0x460] sm:$0xff]
    %v251 = vld [vmem:[#allocation6 + $0x468] sm:$0xff]
    %v252 = vld [vmem:[#allocation6 + $0x470] sm:$0xff]
    %v253 = vld [vmem:[#allocation6 + $0x478] sm:$0xff]
    %v254 = vld [vmem:[#allocation6 + $0x480] sm:$0xff]
    %v255 = vld [vmem:[#allocation6 + $0x488] sm:$0xff]
    %v256 = vld [vmem:[#allocation6 + $0x490] sm:$0xff]
    %v257 = vld [vmem:[#allocation6 + $0x498] sm:$0xff]
    %v258 = vld [vmem:[#allocation6 + $0x4a0] sm:$0xff]
    %v259 = vld [vmem:[#allocation6 + $0x4a8] sm:$0xff]
    %v260 = vld [vmem:[#allocation6 + $0x4b0] sm:$0xff]
    %v261 = vld [vmem:[#allocation6 + $0x4b8] sm:$0xff]
    %v262 = vld [vmem:[#allocation6 + $0x4c0] sm:$0xff]
    %v263 = vld [vmem:[#allocation6 + $0x4c8] sm:$0xff]
    %v264 = vld [vmem:[#allocation6 + $0x4d0] sm:$0xff]
    %v265 = vld [vmem:[#allocation6 + $0x4d8] sm:$0xff]
    %v266 = vld [vmem:[#allocation6 + $0x4e0] sm:$0xff]
    %v267 = vld [vmem:[#allocation6 + $0x4e8] sm:$0xff]
    %v268 = vld [vmem:[#allocation6 + $0x4f0] sm:$0xff]
    %v269 = vld [vmem:[#allocation6 + $0x4f8] sm:$0xff]
    %v270 = vld [vmem:[#allocation6 + $0x500] sm:$0xff]
    %v271 = vld [vmem:[#allocation6 + $0x508] sm:$0xff]
    %v272 = vld [vmem:[#allocation6 + $0x510] sm:$0xff]
    %v273 = vld [vmem:[#allocation6 + $0x518] sm:$0xff]
    %v274 = vld [vmem:[#allocation6 + $0x520] sm:$0xff]
    %v275 = vld [vmem:[#allocation6 + $0x528] sm:$0xff]
    %v276 = vld [vmem:[#allocation6 + $0x530] sm:$0xff]
    %v277 = vld [vmem:[#allocation6 + $0x538] sm:$0xff]
    %v278 = vld [vmem:[#allocation6 + $0x540] sm:$0xff]
    %v279 = vld [vmem:[#allocation6 + $0x548] sm:$0xff]
    %v280 = vld [vmem:[#allocation6 + $0x550] sm:$0xff]
    %v281 = vld [vmem:[#allocation6 + $0x558] sm:$0xff]
    %v282 = vld [vmem:[#allocation6 + $0x560] sm:$0xff]
    %v283 = vld [vmem:[#allocation6 + $0x568] sm:$0xff]
    %v284 = vld [vmem:[#allocation6 + $0x570] sm:$0xff]
    %v285 = vld [vmem:[#allocation6 + $0x578] sm:$0xff]
    %v286 = vld [vmem:[#allocation6 + $0x580] sm:$0xff]
    %v287 = vld [vmem:[#allocation6 + $0x588] sm:$0xff]
    %v288 = vld [vmem:[#allocation6 + $0x590] sm:$0xff]
    %v289 = vld [vmem:[#allocation6 + $0x598] sm:$0xff]
    %v290 = vld [vmem:[#allocation6 + $0x5a0] sm:$0xff]
    %v291 = vld [vmem:[#allocation6 + $0x5a8] sm:$0xff]
    %v292 = vld [vmem:[#allocation6 + $0x5b0] sm:$0xff]
    %v293 = vld [vmem:[#allocation6 + $0x5b8] sm:$0xff]
    %v294 = vld [vmem:[#allocation6 + $0x5c0] sm:$0xff]
    %v295 = vld [vmem:[#allocation6 + $0x5c8] sm:$0xff]
    %v296 = vld [vmem:[#allocation6 + $0x5d0] sm:$0xff]
    %v297 = vld [vmem:[#allocation6 + $0x5d8] sm:$0xff]
    %v298 = vld [vmem:[#allocation6 + $0x5e0] sm:$0xff]
    %v299 = vld [vmem:[#allocation6 + $0x5e8] sm:$0xff]
    %v300 = vld [vmem:[#allocation6 + $0x5f0] sm:$0xff]
    %v301 = vld [vmem:[#allocation6 + $0x5f8] sm:$0xff]
    %v302 = vld [vmem:[%s2] sm:$0x3]
    %v304 = vperm.slane %v302, 0
    %v305 = vperm.slane %v302, 1
    %308 = vmatpush.msra.mxu0 %v140
    %309 = vmatpush.msra.mxu0 %v138
    %310 = vmatpush.msra.mxu0 %v136
    %311 = vmatpush.msra.mxu0 %v134
    %312 = vmatpush.msra.mxu0 %v132
    %313 = vmatpush.msra.mxu0 %v130
    %314 = vmatpush.msra.mxu0 %v128
    %315 = vmatpush.msra.mxu0 %v126
    %316 = vmatpush.msra.mxu0 %v124
    %317 = vmatpush.msra.mxu0 %v122
    %318 = vmatpush.msra.mxu0 %v120
    %319 = vmatpush.msra.mxu0 %v118
    %320 = vmatpush.msra.mxu0 %v116
    %321 = vmatpush.msra.mxu0 %v114
    %322 = vmatpush.msra.mxu0 %v112
    %323 = vmatpush.msra.mxu0 %v110
    %324 = vmatmul.f32.gmra.mxu0 %v98
    %v325 = vpop.f32.mrf.mxu0
    %v326 = vadd.f32 %v304, %v325
    %327 = vmatmul.f32.gmra.mxu0 %v104
    %v328 = vpop.f32.mrf.mxu0
    %v329 = vadd.f32 %v304, %v328
    %330 = vdwg.mxu0
    %331 = vmatpush.msra.mxu0 %v172
    %332 = vmatpush.msra.mxu0 %v170
    %333 = vmatpush.msra.mxu0 %v168
    %334 = vmatpush.msra.mxu0 %v166
    %335 = vmatpush.msra.mxu0 %v164
    %336 = vmatpush.msra.mxu0 %v162
    %337 = vmatpush.msra.mxu0 %v160
    %338 = vmatpush.msra.mxu0 %v158
    %339 = vmatpush.msra.mxu0 %v156
    %340 = vmatpush.msra.mxu0 %v154
    %341 = vmatpush.msra.mxu0 %v152
    %342 = vmatpush.msra.mxu0 %v150
    %343 = vmatpush.msra.mxu0 %v148
    %344 = vmatpush.msra.mxu0 %v146
    %345 = vmatpush.msra.mxu0 %v144
    %346 = vmatpush.msra.mxu0 %v142
    %347 = vmatmul.f32.gmra.mxu0 %v99
    %v348 = vpop.f32.mrf.mxu0
    %v349 = vadd.f32 %v326, %v348
    %350 = vmatmul.f32.gmra.mxu0 %v105
    %v351 = vpop.f32.mrf.mxu0
    %v352 = vadd.f32 %v329, %v351
    %353 = vdwg.mxu0
    %354 = vmatpush.msra.mxu0 %v204
    %355 = vmatpush.msra.mxu0 %v202
    %356 = vmatpush.msra.mxu0 %v200
    %357 = vmatpush.msra.mxu0 %v198
    %358 = vmatpush.msra.mxu0 %v196
    %359 = vmatpush.msra.mxu0 %v194
    %360 = vmatpush.msra.mxu0 %v192
    %361 = vmatpush.msra.mxu0 %v190
    %362 = vmatpush.msra.mxu0 %v188
    %363 = vmatpush.msra.mxu0 %v186
    %364 = vmatpush.msra.mxu0 %v184
    %365 = vmatpush.msra.mxu0 %v182
    %366 = vmatpush.msra.mxu0 %v180
    %367 = vmatpush.msra.mxu0 %v178
    %368 = vmatpush.msra.mxu0 %v176
    %369 = vmatpush.msra.mxu0 %v174
    %370 = vmatmul.f32.gmra.mxu0 %v100
    %v371 = vpop.f32.mrf.mxu0
    %v372 = vadd.f32 %v349, %v371
    %373 = vmatmul.f32.gmra.mxu0 %v106
    %v374 = vpop.f32.mrf.mxu0
    %v375 = vadd.f32 %v352, %v374
    %376 = vdwg.mxu0
    %377 = vmatpush.msra.mxu0 %v236
    %378 = vmatpush.msra.mxu0 %v234
    %379 = vmatpush.msra.mxu0 %v232
    %380 = vmatpush.msra.mxu0 %v230
    %381 = vmatpush.msra.mxu0 %v228
    %382 = vmatpush.msra.mxu0 %v226
    %383 = vmatpush.msra.mxu0 %v224
    %384 = vmatpush.msra.mxu0 %v222
    %385 = vmatpush.msra.mxu0 %v220
    %386 = vmatpush.msra.mxu0 %v218
    %387 = vmatpush.msra.mxu0 %v216
    %388 = vmatpush.msra.mxu0 %v214
    %389 = vmatpush.msra.mxu0 %v212
    %390 = vmatpush.msra.mxu0 %v210
    %391 = vmatpush.msra.mxu0 %v208
    %392 = vmatpush.msra.mxu0 %v206
    %393 = vmatmul.f32.gmra.mxu0 %v101
    %v394 = vpop.f32.mrf.mxu0
    %v395 = vadd.f32 %v372, %v394
    %396 = vmatmul.f32.gmra.mxu0 %v107
    %v397 = vpop.f32.mrf.mxu0
    %v398 = vadd.f32 %v375, %v397
    %399 = vdwg.mxu0
    %400 = vmatpush.msra.mxu0 %v268
    %401 = vmatpush.msra.mxu0 %v266
    %402 = vmatpush.msra.mxu0 %v264
    %403 = vmatpush.msra.mxu0 %v262
    %404 = vmatpush.msra.mxu0 %v260
    %405 = vmatpush.msra.mxu0 %v258
    %406 = vmatpush.msra.mxu0 %v256
    %407 = vmatpush.msra.mxu0 %v254
    %408 = vmatpush.msra.mxu0 %v252
    %409 = vmatpush.msra.mxu0 %v250
    %410 = vmatpush.msra.mxu0 %v248
    %411 = vmatpush.msra.mxu0 %v246
    %412 = vmatpush.msra.mxu0 %v244
    %413 = vmatpush.msra.mxu0 %v242
    %414 = vmatpush.msra.mxu0 %v240
    %415 = vmatpush.msra.mxu0 %v238
    %416 = vmatmul.f32.gmra.mxu0 %v102
    %v417 = vpop.f32.mrf.mxu0
    %v418 = vadd.f32 %v395, %v417
    %419 = vmatmul.f32.gmra.mxu0 %v108
    %v420 = vpop.f32.mrf.mxu0
    %v421 = vadd.f32 %v398, %v420
    %422 = vdwg.mxu0
    %423 = vmatpush.msra.mxu0 %v300
    %424 = vmatpush.msra.mxu0 %v298
    %425 = vmatpush.msra.mxu0 %v296
    %426 = vmatpush.msra.mxu0 %v294
    %427 = vmatpush.msra.mxu0 %v292
    %428 = vmatpush.msra.mxu0 %v290
    %429 = vmatpush.msra.mxu0 %v288
    %430 = vmatpush.msra.mxu0 %v286
    %431 = vmatpush.msra.mxu0 %v284
    %432 = vmatpush.msra.mxu0 %v282
    %433 = vmatpush.msra.mxu0 %v280
    %434 = vmatpush.msra.mxu0 %v278
    %435 = vmatpush.msra.mxu0 %v276
    %436 = vmatpush.msra.mxu0 %v274
    %437 = vmatpush.msra.mxu0 %v272
    %438 = vmatpush.msra.mxu0 %v270
    %439 = vmatmul.f32.gmra.mxu0 %v103
    %v440 = vpop.f32.mrf.mxu0
    %v441 = vadd.f32 %v418, %v440
    %442 = vmatmul.f32.gmra.mxu0 %v109
    %v443 = vpop.f32.mrf.mxu0
    %v444 = vadd.f32 %v421, %v443
    %445 = vdwg.mxu0
    %446 = vmatpush.msra.mxu0 %v141
    %447 = vmatpush.msra.mxu0 %v139
    %448 = vmatpush.msra.mxu0 %v137
    %449 = vmatpush.msra.mxu0 %v135
    %450 = vmatpush.msra.mxu0 %v133
    %451 = vmatpush.msra.mxu0 %v131
    %452 = vmatpush.msra.mxu0 %v129
    %453 = vmatpush.msra.mxu0 %v127
    %454 = vmatpush.msra.mxu0 %v125
    %455 = vmatpush.msra.mxu0 %v123
    %456 = vmatpush.msra.mxu0 %v121
    %457 = vmatpush.msra.mxu0 %v119
    %458 = vmatpush.msra.mxu0 %v117
    %459 = vmatpush.msra.mxu0 %v115
    %460 = vmatpush.msra.mxu0 %v113
    %461 = vmatpush.msra.mxu0 %v111
    %462 = vmatmul.f32.gmra.mxu0 %v98
    %v463 = vpop.f32.mrf.mxu0
    %v464 = vadd.f32 %v305, %v463
    %465 = vmatmul.f32.gmra.mxu0 %v104
    %v466 = vpop.f32.mrf.mxu0
    %v467 = vadd.f32 %v305, %v466
    %468 = vdwg.mxu0
    %469 = vmatpush.msra.mxu0 %v173
    %470 = vmatpush.msra.mxu0 %v171
    %471 = vmatpush.msra.mxu0 %v169
    %472 = vmatpush.msra.mxu0 %v167
    %473 = vmatpush.msra.mxu0 %v165
    %474 = vmatpush.msra.mxu0 %v163
    %475 = vmatpush.msra.mxu0 %v161
    %476 = vmatpush.msra.mxu0 %v159
    %477 = vmatpush.msra.mxu0 %v157
    %478 = vmatpush.msra.mxu0 %v155
    %479 = vmatpush.msra.mxu0 %v153
    %480 = vmatpush.msra.mxu0 %v151
    %481 = vmatpush.msra.mxu0 %v149
    %482 = vmatpush.msra.mxu0 %v147
    %483 = vmatpush.msra.mxu0 %v145
    %484 = vmatpush.msra.mxu0 %v143
    %485 = vmatmul.f32.gmra.mxu0 %v99
    %v486 = vpop.f32.mrf.mxu0
    %v487 = vadd.f32 %v464, %v486
    %488 = vmatmul.f32.gmra.mxu0 %v105
    %v489 = vpop.f32.mrf.mxu0
    %v490 = vadd.f32 %v467, %v489
    %491 = vdwg.mxu0
    %492 = vmatpush.msra.mxu0 %v205
    %493 = vmatpush.msra.mxu0 %v203
    %494 = vmatpush.msra.mxu0 %v201
    %495 = vmatpush.msra.mxu0 %v199
    %496 = vmatpush.msra.mxu0 %v197
    %497 = vmatpush.msra.mxu0 %v195
    %498 = vmatpush.msra.mxu0 %v193
    %499 = vmatpush.msra.mxu0 %v191
    %500 = vmatpush.msra.mxu0 %v189
    %501 = vmatpush.msra.mxu0 %v187
    %502 = vmatpush.msra.mxu0 %v185
    %503 = vmatpush.msra.mxu0 %v183
    %504 = vmatpush.msra.mxu0 %v181
    %505 = vmatpush.msra.mxu0 %v179
    %506 = vmatpush.msra.mxu0 %v177
    %507 = vmatpush.msra.mxu0 %v175
    %508 = vmatmul.f32.gmra.mxu0 %v100
    %v509 = vpop.f32.mrf.mxu0
    %v510 = vadd.f32 %v487, %v509
    %511 = vmatmul.f32.gmra.mxu0 %v106
    %v512 = vpop.f32.mrf.mxu0
    %v513 = vadd.f32 %v490, %v512
    %514 = vdwg.mxu0
    %515 = vmatpush.msra.mxu0 %v237
    %516 = vmatpush.msra.mxu0 %v235
    %517 = vmatpush.msra.mxu0 %v233
    %518 = vmatpush.msra.mxu0 %v231
    %519 = vmatpush.msra.mxu0 %v229
    %520 = vmatpush.msra.mxu0 %v227
    %521 = vmatpush.msra.mxu0 %v225
    %522 = vmatpush.msra.mxu0 %v223
    %523 = vmatpush.msra.mxu0 %v221
    %524 = vmatpush.msra.mxu0 %v219
    %525 = vmatpush.msra.mxu0 %v217
    %526 = vmatpush.msra.mxu0 %v215
    %527 = vmatpush.msra.mxu0 %v213
    %528 = vmatpush.msra.mxu0 %v211
    %529 = vmatpush.msra.mxu0 %v209
    %530 = vmatpush.msra.mxu0 %v207
    %531 = vmatmul.f32.gmra.mxu0 %v101
    %v532 = vpop.f32.mrf.mxu0
    %v533 = vadd.f32 %v510, %v532
    %534 = vmatmul.f32.gmra.mxu0 %v107
    %v535 = vpop.f32.mrf.mxu0
    %v536 = vadd.f32 %v513, %v535
    %537 = vdwg.mxu0
    %538 = vmatpush.msra.mxu0 %v269
    %539 = vmatpush.msra.mxu0 %v267
    %540 = vmatpush.msra.mxu0 %v265
    %541 = vmatpush.msra.mxu0 %v263
    %542 = vmatpush.msra.mxu0 %v261
    %543 = vmatpush.msra.mxu0 %v259
    %544 = vmatpush.msra.mxu0 %v257
    %545 = vmatpush.msra.mxu0 %v255
    %546 = vmatpush.msra.mxu0 %v253
    %547 = vmatpush.msra.mxu0 %v251
    %548 = vmatpush.msra.mxu0 %v249
    %549 = vmatpush.msra.mxu0 %v247
    %550 = vmatpush.msra.mxu0 %v245
    %551 = vmatpush.msra.mxu0 %v243
    %552 = vmatpush.msra.mxu0 %v241
    %553 = vmatpush.msra.mxu0 %v239
    %554 = vmatmul.f32.gmra.mxu0 %v102
    %v555 = vpop.f32.mrf.mxu0
    %v556 = vadd.f32 %v533, %v555
    %557 = vmatmul.f32.gmra.mxu0 %v108
    %v558 = vpop.f32.mrf.mxu0
    %v559 = vadd.f32 %v536, %v558
    %560 = vdwg.mxu0
    %561 = vmatpush.msra.mxu0 %v301
    %562 = vmatpush.msra.mxu0 %v299
    %563 = vmatpush.msra.mxu0 %v297
    %564 = vmatpush.msra.mxu0 %v295
    %565 = vmatpush.msra.mxu0 %v293
    %566 = vmatpush.msra.mxu0 %v291
    %567 = vmatpush.msra.mxu0 %v289
    %568 = vmatpush.msra.mxu0 %v287
    %569 = vmatpush.msra.mxu0 %v285
    %570 = vmatpush.msra.mxu0 %v283
    %571 = vmatpush.msra.mxu0 %v281
    %572 = vmatpush.msra.mxu0 %v279
    %573 = vmatpush.msra.mxu0 %v277
    %574 = vmatpush.msra.mxu0 %v275
    %575 = vmatpush.msra.mxu0 %v273
    %576 = vmatpush.msra.mxu0 %v271
    %577 = vmatmul.f32.gmra.mxu0 %v103
    %v578 = vpop.f32.mrf.mxu0
    %v579 = vadd.f32 %v556, %v578
    %580 = vmatmul.f32.gmra.mxu0 %v109
    %v581 = vpop.f32.mrf.mxu0
    %v582 = vadd.f32 %v559, %v581
    %583 = vdwg.mxu0
    %v584 = vld [vmem:[#allocation8] sm:$0xff]
    %v585 = vld [vmem:[#allocation8 + $0x8] sm:$0xff]
    %v586 = vld [vmem:[#allocation8 + $0x10] sm:$0xff]
    %v587 = vld [vmem:[#allocation8 + $0x18] sm:$0xff]
    %v588 = vld [vmem:[#allocation8 + $0x20] sm:$0xff]
    %v589 = vld [vmem:[#allocation8 + $0x28] sm:$0xff]
    %v590 = vld [vmem:[#allocation8 + $0x30] sm:$0xff]
    %v591 = vld [vmem:[#allocation8 + $0x38] sm:$0xff]
    %v592 = vld [vmem:[#allocation8 + $0x40] sm:$0xff]
    %v593 = vld [vmem:[#allocation8 + $0x48] sm:$0xff]
    %v594 = vld [vmem:[#allocation8 + $0x50] sm:$0xff]
    %v595 = vld [vmem:[#allocation8 + $0x58] sm:$0xff]
    %v596 = vld [vmem:[#allocation8 + $0x60] sm:$0xff]
    %v597 = vld [vmem:[#allocation8 + $0x68] sm:$0xff]
    %v598 = vld [vmem:[#allocation8 + $0x70] sm:$0xff]
    %v599 = vld [vmem:[#allocation8 + $0x78] sm:$0xff]
    %v600 = vld [vmem:[#allocation8 + $0x80] sm:$0xff]
    %v601 = vld [vmem:[#allocation8 + $0x88] sm:$0xff]
    %v602 = vld [vmem:[#allocation8 + $0x90] sm:$0xff]
    %v603 = vld [vmem:[#allocation8 + $0x98] sm:$0xff]
    %v604 = vld [vmem:[#allocation8 + $0xa0] sm:$0xff]
    %v605 = vld [vmem:[#allocation8 + $0xa8] sm:$0xff]
    %v606 = vld [vmem:[#allocation8 + $0xb0] sm:$0xff]
    %v607 = vld [vmem:[#allocation8 + $0xb8] sm:$0xff]
    %v608 = vld [vmem:[#allocation8 + $0xc0] sm:$0xff]
    %v609 = vld [vmem:[#allocation8 + $0xc8] sm:$0xff]
    %v610 = vld [vmem:[#allocation8 + $0xd0] sm:$0xff]
    %v611 = vld [vmem:[#allocation8 + $0xd8] sm:$0xff]
    %v612 = vld [vmem:[#allocation8 + $0xe0] sm:$0xff]
    %v613 = vld [vmem:[#allocation8 + $0xe8] sm:$0xff]
    %v614 = vld [vmem:[#allocation8 + $0xf0] sm:$0xff]
    %v615 = vld [vmem:[#allocation8 + $0xf8] sm:$0xff]
    %v616 = vld [vmem:[#allocation8 + $0x100] sm:$0xff]
    %v617 = vld [vmem:[#allocation8 + $0x108] sm:$0xff]
    %v618 = vld [vmem:[#allocation8 + $0x110] sm:$0xff]
    %v619 = vld [vmem:[#allocation8 + $0x118] sm:$0xff]
    %v620 = vld [vmem:[#allocation8 + $0x120] sm:$0xff]
    %v621 = vld [vmem:[#allocation8 + $0x128] sm:$0xff]
    %v622 = vld [vmem:[#allocation8 + $0x130] sm:$0xff]
    %v623 = vld [vmem:[#allocation8 + $0x138] sm:$0xff]
    %v624 = vld [vmem:[#allocation8 + $0x140] sm:$0xff]
    %v625 = vld [vmem:[#allocation8 + $0x148] sm:$0xff]
    %v626 = vld [vmem:[#allocation8 + $0x150] sm:$0xff]
    %v627 = vld [vmem:[#allocation8 + $0x158] sm:$0xff]
    %v628 = vld [vmem:[#allocation8 + $0x160] sm:$0xff]
    %v629 = vld [vmem:[#allocation8 + $0x168] sm:$0xff]
    %v630 = vld [vmem:[#allocation8 + $0x170] sm:$0xff]
    %v631 = vld [vmem:[#allocation8 + $0x178] sm:$0xff]
    %v632 = vld [vmem:[#allocation8 + $0x180] sm:$0xff]
    %v633 = vld [vmem:[#allocation8 + $0x188] sm:$0xff]
    %v634 = vld [vmem:[#allocation8 + $0x190] sm:$0xff]
    %v635 = vld [vmem:[#allocation8 + $0x198] sm:$0xff]
    %v636 = vld [vmem:[#allocation8 + $0x1a0] sm:$0xff]
    %v637 = vld [vmem:[#allocation8 + $0x1a8] sm:$0xff]
    %v638 = vld [vmem:[#allocation8 + $0x1b0] sm:$0xff]
    %v639 = vld [vmem:[#allocation8 + $0x1b8] sm:$0xff]
    %v640 = vld [vmem:[#allocation8 + $0x1c0] sm:$0xff]
    %v641 = vld [vmem:[#allocation8 + $0x1c8] sm:$0xff]
    %v642 = vld [vmem:[#allocation8 + $0x1d0] sm:$0xff]
    %v643 = vld [vmem:[#allocation8 + $0x1d8] sm:$0xff]
    %v644 = vld [vmem:[#allocation8 + $0x1e0] sm:$0xff]
    %v645 = vld [vmem:[#allocation8 + $0x1e8] sm:$0xff]
    %v646 = vld [vmem:[#allocation8 + $0x1f0] sm:$0xff]
    %v647 = vld [vmem:[#allocation8 + $0x1f8] sm:$0xff]
    %v648 = vld [vmem:[%s4] sm:$0x3]
    %v650 = vperm.slane %v648, 0
    %v651 = vperm.slane %v648, 1
    %654 = vmatpush.msra.mxu0 %v614
    %655 = vmatpush.msra.mxu0 %v612
    %656 = vmatpush.msra.mxu0 %v610
    %657 = vmatpush.msra.mxu0 %v608
    %658 = vmatpush.msra.mxu0 %v606
    %659 = vmatpush.msra.mxu0 %v604
    %660 = vmatpush.msra.mxu0 %v602
    %661 = vmatpush.msra.mxu0 %v600
    %662 = vmatpush.msra.mxu0 %v598
    %663 = vmatpush.msra.mxu0 %v596
    %664 = vmatpush.msra.mxu0 %v594
    %665 = vmatpush.msra.mxu0 %v592
    %666 = vmatpush.msra.mxu0 %v590
    %667 = vmatpush.msra.mxu0 %v588
    %668 = vmatpush.msra.mxu0 %v586
    %669 = vmatpush.msra.mxu0 %v584
    %670 = vmatmul.f32.gmra.mxu0 %v441
    %v671 = vpop.f32.mrf.mxu0
    %v672 = vadd.f32 %v650, %v671
    %673 = vmatmul.f32.gmra.mxu0 %v444
    %v674 = vpop.f32.mrf.mxu0
    %v675 = vadd.f32 %v650, %v674
    %676 = vdwg.mxu0
    %677 = vmatpush.msra.mxu0 %v646
    %678 = vmatpush.msra.mxu0 %v644
    %679 = vmatpush.msra.mxu0 %v642
    %680 = vmatpush.msra.mxu0 %v640
    %681 = vmatpush.msra.mxu0 %v638
    %682 = vmatpush.msra.mxu0 %v636
    %683 = vmatpush.msra.mxu0 %v634
    %684 = vmatpush.msra.mxu0 %v632
    %685 = vmatpush.msra.mxu0 %v630
    %686 = vmatpush.msra.mxu0 %v628
    %687 = vmatpush.msra.mxu0 %v626
    %688 = vmatpush.msra.mxu0 %v624
    %689 = vmatpush.msra.mxu0 %v622
    %690 = vmatpush.msra.mxu0 %v620
    %691 = vmatpush.msra.mxu0 %v618
    %692 = vmatpush.msra.mxu0 %v616
    %693 = vmatmul.f32.gmra.mxu0 %v579
    %v694 = vpop.f32.mrf.mxu0
    %v695 = vadd.f32 %v672, %v694
    %696 = vmatmul.f32.gmra.mxu0 %v582
    %v697 = vpop.f32.mrf.mxu0
    %v698 = vadd.f32 %v675, %v697
    %699 = vdwg.mxu0
    %700 = vmatpush.msra.mxu0 %v615
    %701 = vmatpush.msra.mxu0 %v613
    %702 = vmatpush.msra.mxu0 %v611
    %703 = vmatpush.msra.mxu0 %v609
    %704 = vmatpush.msra.mxu0 %v607
    %705 = vmatpush.msra.mxu0 %v605
    %706 = vmatpush.msra.mxu0 %v603
    %707 = vmatpush.msra.mxu0 %v601
    %708 = vmatpush.msra.mxu0 %v599
    %709 = vmatpush.msra.mxu0 %v597
    %710 = vmatpush.msra.mxu0 %v595
    %711 = vmatpush.msra.mxu0 %v593
    %712 = vmatpush.msra.mxu0 %v591
    %713 = vmatpush.msra.mxu0 %v589
    %714 = vmatpush.msra.mxu0 %v587
    %715 = vmatpush.msra.mxu0 %v585
    %716 = vmatmul.f32.gmra.mxu0 %v441
    %v717 = vpop.f32.mrf.mxu0
    %v718 = vadd.f32 %v651, %v717
    %719 = vmatmul.f32.gmra.mxu0 %v444
    %v720 = vpop.f32.mrf.mxu0
    %v721 = vadd.f32 %v651, %v720
    %722 = vdwg.mxu0
    %723 = vmatpush.msra.mxu0 %v647
    %724 = vmatpush.msra.mxu0 %v645
    %725 = vmatpush.msra.mxu0 %v643
    %726 = vmatpush.msra.mxu0 %v641
    %727 = vmatpush.msra.mxu0 %v639
    %728 = vmatpush.msra.mxu0 %v637
    %729 = vmatpush.msra.mxu0 %v635
    %730 = vmatpush.msra.mxu0 %v633
    %731 = vmatpush.msra.mxu0 %v631
    %732 = vmatpush.msra.mxu0 %v629
    %733 = vmatpush.msra.mxu0 %v627
    %734 = vmatpush.msra.mxu0 %v625
    %735 = vmatpush.msra.mxu0 %v623
    %736 = vmatpush.msra.mxu0 %v621
    %737 = vmatpush.msra.mxu0 %v619
    %738 = vmatpush.msra.mxu0 %v617
    %739 = vmatmul.f32.gmra.mxu0 %v579
    %v740 = vpop.f32.mrf.mxu0
    %v741 = vadd.f32 %v718, %v740
    %742 = vmatmul.f32.gmra.mxu0 %v582
    %v743 = vpop.f32.mrf.mxu0
    %v744 = vadd.f32 %v721, %v743
    %745 = vdwg.mxu0
    %v746 = vmax.f32 %v695, 0.0
    %v747 = vmax.f32 %v741, 0.0
    %v748 = vmax.f32 %v698, 0.0
    %v749 = vmax.f32 %v744, 0.0
    %v750 = vld [vmem:[#allocation9] sm:$0xff]
    %v751 = vld [vmem:[#allocation9 + $0x8] sm:$0xff]
    %v752 = vld [vmem:[#allocation9 + $0x10] sm:$0xff]
    %v753 = vld [vmem:[#allocation9 + $0x18] sm:$0xff]
    %v754 = vld [vmem:[#allocation9 + $0x20] sm:$0xff]
    %v755 = vld [vmem:[#allocation9 + $0x28] sm:$0xff]
    %v756 = vld [vmem:[#allocation9 + $0x30] sm:$0xff]
    %v757 = vld [vmem:[#allocation9 + $0x38] sm:$0xff]
    %v758 = vld [vmem:[#allocation9 + $0x40] sm:$0xff]
    %v759 = vld [vmem:[#allocation9 + $0x48] sm:$0xff]
    %v760 = vld [vmem:[#allocation9 + $0x50] sm:$0xff]
    %v761 = vld [vmem:[#allocation9 + $0x58] sm:$0xff]
    %v762 = vld [vmem:[#allocation9 + $0x60] sm:$0xff]
    %v763 = vld [vmem:[#allocation9 + $0x68] sm:$0xff]
    %v764 = vld [vmem:[#allocation9 + $0x70] sm:$0xff]
    %v765 = vld [vmem:[#allocation9 + $0x78] sm:$0xff]
    %v766 = vld [vmem:[#allocation9 + $0x80] sm:$0xff]
    %v767 = vld [vmem:[#allocation9 + $0x88] sm:$0xff]
    %v768 = vld [vmem:[#allocation9 + $0x90] sm:$0xff]
    %v769 = vld [vmem:[#allocation9 + $0x98] sm:$0xff]
    %v770 = vld [vmem:[#allocation9 + $0xa0] sm:$0xff]
    %v771 = vld [vmem:[#allocation9 + $0xa8] sm:$0xff]
    %v772 = vld [vmem:[#allocation9 + $0xb0] sm:$0xff]
    %v773 = vld [vmem:[#allocation9 + $0xb8] sm:$0xff]
    %v774 = vld [vmem:[#allocation9 + $0xc0] sm:$0xff]
    %v775 = vld [vmem:[#allocation9 + $0xc8] sm:$0xff]
    %v776 = vld [vmem:[#allocation9 + $0xd0] sm:$0xff]
    %v777 = vld [vmem:[#allocation9 + $0xd8] sm:$0xff]
    %v778 = vld [vmem:[#allocation9 + $0xe0] sm:$0xff]
    %v779 = vld [vmem:[#allocation9 + $0xe8] sm:$0xff]
    %v780 = vld [vmem:[#allocation9 + $0xf0] sm:$0xff]
    %v781 = vld [vmem:[#allocation9 + $0xf8] sm:$0xff]
    %v782 = vld [vmem:[#allocation9 + $0x100] sm:$0xff]
    %v783 = vld [vmem:[#allocation9 + $0x108] sm:$0xff]
    %v784 = vld [vmem:[#allocation9 + $0x110] sm:$0xff]
    %v785 = vld [vmem:[#allocation9 + $0x118] sm:$0xff]
    %v786 = vld [vmem:[#allocation9 + $0x120] sm:$0xff]
    %v787 = vld [vmem:[#allocation9 + $0x128] sm:$0xff]
    %v788 = vld [vmem:[#allocation9 + $0x130] sm:$0xff]
    %v789 = vld [vmem:[#allocation9 + $0x138] sm:$0xff]
    %v790 = vld [vmem:[#allocation9 + $0x140] sm:$0xff]
    %v791 = vld [vmem:[#allocation9 + $0x148] sm:$0xff]
    %v792 = vld [vmem:[#allocation9 + $0x150] sm:$0xff]
    %v793 = vld [vmem:[#allocation9 + $0x158] sm:$0xff]
    %v794 = vld [vmem:[#allocation9 + $0x160] sm:$0xff]
    %v795 = vld [vmem:[#allocation9 + $0x168] sm:$0xff]
    %v796 = vld [vmem:[#allocation9 + $0x170] sm:$0xff]
    %v797 = vld [vmem:[#allocation9 + $0x178] sm:$0xff]
    %v798 = vld [vmem:[#allocation9 + $0x180] sm:$0xff]
    %v799 = vld [vmem:[#allocation9 + $0x188] sm:$0xff]
    %v800 = vld [vmem:[#allocation9 + $0x190] sm:$0xff]
    %v801 = vld [vmem:[#allocation9 + $0x198] sm:$0xff]
    %v802 = vld [vmem:[#allocation9 + $0x1a0] sm:$0xff]
    %v803 = vld [vmem:[#allocation9 + $0x1a8] sm:$0xff]
    %v804 = vld [vmem:[#allocation9 + $0x1b0] sm:$0xff]
    %v805 = vld [vmem:[#allocation9 + $0x1b8] sm:$0xff]
    %v806 = vld [vmem:[#allocation9 + $0x1c0] sm:$0xff]
    %v807 = vld [vmem:[#allocation9 + $0x1c8] sm:$0xff]
    %v808 = vld [vmem:[#allocation9 + $0x1d0] sm:$0xff]
    %v809 = vld [vmem:[#allocation9 + $0x1d8] sm:$0xff]
    %v810 = vld [vmem:[#allocation9 + $0x1e0] sm:$0xff]
    %v811 = vld [vmem:[#allocation9 + $0x1e8] sm:$0xff]
    %v812 = vld [vmem:[#allocation9 + $0x1f0] sm:$0xff]
    %v813 = vld [vmem:[#allocation9 + $0x1f8] sm:$0xff]
    %v814 = vld [vmem:[%s6] sm:$0x3]
    %v816 = vperm.slane %v814, 0
    %v817 = vperm.slane %v814, 1
    %820 = vmatpush.msra.mxu0 %v780
    %821 = vmatpush.msra.mxu0 %v778
    %822 = vmatpush.msra.mxu0 %v776
    %823 = vmatpush.msra.mxu0 %v774
    %824 = vmatpush.msra.mxu0 %v772
    %825 = vmatpush.msra.mxu0 %v770
    %826 = vmatpush.msra.mxu0 %v768
    %827 = vmatpush.msra.mxu0 %v766
    %828 = vmatpush.msra.mxu0 %v764
    %829 = vmatpush.msra.mxu0 %v762
    %830 = vmatpush.msra.mxu0 %v760
    %831 = vmatpush.msra.mxu0 %v758
    %832 = vmatpush.msra.mxu0 %v756
    %833 = vmatpush.msra.mxu0 %v754
    %834 = vmatpush.msra.mxu0 %v752
    %835 = vmatpush.msra.mxu0 %v750
    %836 = vmatmul.f32.gmra.mxu0 %v746
    %v837 = vpop.f32.mrf.mxu0
    %v838 = vadd.f32 %v816, %v837
    %839 = vmatmul.f32.gmra.mxu0 %v748
    %v840 = vpop.f32.mrf.mxu0
    %v841 = vadd.f32 %v816, %v840
    %842 = vdwg.mxu0
    %843 = vmatpush.msra.mxu0 %v812
    %844 = vmatpush.msra.mxu0 %v810
    %845 = vmatpush.msra.mxu0 %v808
    %846 = vmatpush.msra.mxu0 %v806
    %847 = vmatpush.msra.mxu0 %v804
    %848 = vmatpush.msra.mxu0 %v802
    %849 = vmatpush.msra.mxu0 %v800
    %850 = vmatpush.msra.mxu0 %v798
    %851 = vmatpush.msra.mxu0 %v796
    %852 = vmatpush.msra.mxu0 %v794
    %853 = vmatpush.msra.mxu0 %v792
    %854 = vmatpush.msra.mxu0 %v790
    %855 = vmatpush.msra.mxu0 %v788
    %856 = vmatpush.msra.mxu0 %v786
    %857 = vmatpush.msra.mxu0 %v784
    %858 = vmatpush.msra.mxu0 %v782
    %859 = vmatmul.f32.gmra.mxu0 %v747
    %v860 = vpop.f32.mrf.mxu0
    %v861 = vadd.f32 %v838, %v860
    %862 = vmatmul.f32.gmra.mxu0 %v749
    %v863 = vpop.f32.mrf.mxu0
    %v864 = vadd.f32 %v841, %v863
    %865 = vdwg.mxu0
    %866 = vmatpush.msra.mxu0 %v781
    %867 = vmatpush.msra.mxu0 %v779
    %868 = vmatpush.msra.mxu0 %v777
    %869 = vmatpush.msra.mxu0 %v775
    %870 = vmatpush.msra.mxu0 %v773
    %871 = vmatpush.msra.mxu0 %v771
    %872 = vmatpush.msra.mxu0 %v769
    %873 = vmatpush.msra.mxu0 %v767
    %874 = vmatpush.msra.mxu0 %v765
    %875 = vmatpush.msra.mxu0 %v763
    %876 = vmatpush.msra.mxu0 %v761
    %877 = vmatpush.msra.mxu0 %v759
    %878 = vmatpush.msra.mxu0 %v757
    %879 = vmatpush.msra.mxu0 %v755
    %880 = vmatpush.msra.mxu0 %v753
    %881 = vmatpush.msra.mxu0 %v751
    %882 = vmatmul.f32.gmra.mxu0 %v746
    %v883 = vpop.f32.mrf.mxu0
    %v884 = vadd.f32 %v817, %v883
    %885 = vmatmul.f32.gmra.mxu0 %v748
    %v886 = vpop.f32.mrf.mxu0
    %v887 = vadd.f32 %v817, %v886
    %888 = vdwg.mxu0
    %889 = vmatpush.msra.mxu0 %v813
    %890 = vmatpush.msra.mxu0 %v811
    %891 = vmatpush.msra.mxu0 %v809
    %892 = vmatpush.msra.mxu0 %v807
    %893 = vmatpush.msra.mxu0 %v805
    %894 = vmatpush.msra.mxu0 %v803
    %895 = vmatpush.msra.mxu0 %v801
    %896 = vmatpush.msra.mxu0 %v799
    %897 = vmatpush.msra.mxu0 %v797
    %898 = vmatpush.msra.mxu0 %v795
    %899 = vmatpush.msra.mxu0 %v793
    %900 = vmatpush.msra.mxu0 %v791
    %901 = vmatpush.msra.mxu0 %v789
    %902 = vmatpush.msra.mxu0 %v787
    %903 = vmatpush.msra.mxu0 %v785
    %904 = vmatpush.msra.mxu0 %v783
    %905 = vmatmul.f32.gmra.mxu0 %v747
    %v906 = vpop.f32.mrf.mxu0
    %v907 = vadd.f32 %v884, %v906
    %908 = vmatmul.f32.gmra.mxu0 %v749
    %v909 = vpop.f32.mrf.mxu0
    %v910 = vadd.f32 %v887, %v909
    %911 = vdwg.mxu0
    %v912 = vmax.f32 %v861, %v907
    %913 = vmax.xlane.f32.xlu0 %v912
    %v914 = vpop.xlane.xlu0 %913
    %v915 = vmax.f32 %v864, %v910
    %916 = vmax.xlane.f32.xlu0 %v915
    %v917 = vpop.xlane.xlu0 %916
    %v918 = vsub.f32 %v861, %v914
    %v919 = vsub.f32 %v907, %v914
    %v920 = vsub.f32 %v864, %v917
    %v921 = vsub.f32 %v910, %v917
    %v922 = vmul.f32 %v918, 1.442695
    %v923 = vpow.pop %v922
    %v924 = vmul.f32 %v919, 1.442695
    %v925 = vpow.pop %v924
    %v926 = vmul.f32 %v920, 1.442695
    %v927 = vpow.pop %v926
    %v928 = vmul.f32 %v921, 1.442695
    %v929 = vpow.pop %v928
    %v930 = vadd.f32 %v923, %v925
    %931 = vadd.xlane.f32.xlu0 %v930
    %v932 = vpop.xlane.xlu0 %931
    %v933 = vadd.f32 %v927, %v929
    %934 = vadd.xlane.f32.xlu0 %v933
    %v935 = vpop.xlane.xlu0 %934
    %v936 = vrcp.pop %v932
    %v937 = vrcp.pop %v935
    %v938 = vmul.f32 %v923, %v936
    %v939 = vmul.f32 %v925, %v936
    %v940 = vmul.f32 %v927, %v937
    %v941 = vmul.f32 %v929, %v937
    %v942 = vmul.f32 %v938, %v441
    %v943 = vmul.f32 %v939, %v579
    %v944 = vmul.f32 %v940, %v444
    %v945 = vmul.f32 %v941, %v582
    %v946 = vld [vmem:[%s7] sm:$0x3]
    %v947 = vld [vmem:[#allocation2] sm:$0x1]
    %949 = vset.pattern.permute.xlu0 0
    %950 = vperm.xlu0 %949, %v947
    %v951 = vpop.permute.xlu0 %950
    %v953 = vperm.slane %v951, 0
    %v955 = vperm.slane %v946, 0
    %v956 = vperm.slane %v946, 1
    %959 = vmatpush.xpose.msra.mxu0 0.0
    %960 = vmatpush.xpose.msra.mxu0 0.0
    %961 = vmatpush.xpose.msra.mxu0 0.0
    %962 = vmatpush.xpose.msra.mxu0 0.0
    %963 = vmatpush.xpose.msra.mxu0 0.0
    %964 = vmatpush.xpose.msra.mxu0 0.0
    %965 = vmatpush.xpose.msra.mxu0 0.0
    %966 = vmatpush.xpose.msra.mxu0 0.0
    %967 = vmatpush.xpose.msra.mxu0 0.0
    %968 = vmatpush.xpose.msra.mxu0 0.0
    %969 = vmatpush.xpose.msra.mxu0 0.0
    %970 = vmatpush.xpose.msra.mxu0 0.0
    %971 = vmatpush.xpose.msra.mxu0 0.0
    %972 = vmatpush.xpose.msra.mxu0 0.0
    %973 = vmatpush.xpose.msra.mxu0 %v944
    %974 = vmatpush.xpose.msra.mxu0 %v942
    %975 = vmatmul.f32.gmra.mxu0 %v955
    %v976 = vpop.f32.mrf.mxu0
    %v977 = vadd.f32 %v953, %v976
    %978 = vdwg.mxu0
    %979 = vmatpush.xpose.msra.mxu0 0.0
    %980 = vmatpush.xpose.msra.mxu0 0.0
    %981 = vmatpush.xpose.msra.mxu0 0.0
    %982 = vmatpush.xpose.msra.mxu0 0.0
    %983 = vmatpush.xpose.msra.mxu0 0.0
    %984 = vmatpush.xpose.msra.mxu0 0.0
    %985 = vmatpush.xpose.msra.mxu0 0.0
    %986 = vmatpush.xpose.msra.mxu0 0.0
    %987 = vmatpush.xpose.msra.mxu0 0.0
    %988 = vmatpush.xpose.msra.mxu0 0.0
    %989 = vmatpush.xpose.msra.mxu0 0.0
    %990 = vmatpush.xpose.msra.mxu0 0.0
    %991 = vmatpush.xpose.msra.mxu0 0.0
    %992 = vmatpush.xpose.msra.mxu0 0.0
    %993 = vmatpush.xpose.msra.mxu0 %v945
    %994 = vmatpush.xpose.msra.mxu0 %v943
    %995 = vmatmul.f32.gmra.mxu0 %v956
    %v996 = vpop.f32.mrf.mxu0
    %v997 = vadd.f32 %v977, %v996
    %998 = vdwg.mxu0
    %vm999 = vcmask 122880
    %1000 = vst.msk [vmem:[#allocation11] sm:$0x1] %vm999, %v997
    // Predicated region
    $region54: #{tpu_custom_call.1} parent=1 // pred_check
      _
    $region55: #{tpu_custom_call.1} parent=1 // pred_check_branch
      %1002 = sbr.rel (0) target = $region57
    $region56: #{tpu_custom_call.1} parent=1 // pred_region
      %1004 = vsyncadd [#allocation5], 0
      %s1006 = sshll.u32 [#allocation11], 4
      %s1007 = int_to_ptr.vmem [resolvable:$true] %s1006
      %s1008 = sshll.u32 %s9, 4
      %s1009 = int_to_ptr.hbm [resolvable:$true] %s1008
      %1011 = dma.vmem_to_hbm [thread:$0]  %s1007, 16, %s1009, [#allocation5]
    $region57: #{tpu_custom_call.1} parent=1 // pred_fallthru
      _
    // Predicated region
    $region58: #{tpu_custom_call.1} parent=1 // pred_check
      _
    $region59: #{tpu_custom_call.1} parent=1 // pred_check_branch
      %1013 = sbr.rel (0) target = $region61
    $region60: #{tpu_custom_call.1} parent=1 // pred_region
      %1015 = dma.done [#allocation5], 16
    $region61: #{tpu_custom_call.1} parent=1 // pred_fallthru
      _
    %1016 = vsyncpa [#allocation4], 1
    %1017 = vsyncpa [#allocation7], 1
    %1018 = vsyncpa [#allocation10], 1
    %1019 = vsyncpa [#allocation5], 1

</llo_original>
